<compile_context>
chip_gen: v5e
topology: v5e:2x2
jax: 0.10.0
libtpu: 0.0.40
codegen_flags: <defaults>
</compile_context>

<pallas_src>
import jax
import jax.numpy as jnp
from jax.experimental import pallas as pl
from jax.experimental.pallas import tpu as pltpu


def _round_up(x, m):
    return ((x + m - 1) // m) * m


def _patch_proj_kernel(x_ref, w_ref, b_ref, o_ref):
    # x_ref: (TM, K) bf16 patch rows (streamed per grid step)
    # w_ref: (K, N)  bf16 projection weight (resident across the grid)
    # b_ref: (1, N)  f32 bias (resident)
    # o_ref: (TM, N) f32 output tile
    acc = jnp.dot(x_ref[...], w_ref[...], preferred_element_type=jnp.float32)
    o_ref[...] = (acc + b_ref[...]).astype(o_ref.dtype)


def patch_proj(patches, weight, bias, *, tm_max=512):
    """patches: (M, K), weight: (K, N), bias: (N,) -> (M, N) float32.

    Pads K/N to multiples of 128 and M to a multiple of the row tile, casts
    matmul operands to bf16 (f32 accumulation on the MXU), and tiles the
    matmul over M with the weight/bias resident in VMEM.
    """
    M, K = patches.shape
    _, N = weight.shape

    K_pad = _round_up(K, 128)
    N_pad = _round_up(N, 128)
    M8 = _round_up(M, 8)
    TM = min(tm_max, M8)          # row tile; multiple of 8 by construction
    M_pad = _round_up(M8, TM)

    # Zero-padding is numerically exact: extra K rows/cols contribute 0,
    # extra M rows / N cols are sliced off below.
    x_p = jnp.zeros((M_pad, K_pad), jnp.bfloat16).at[:M, :K].set(
        patches.astype(jnp.bfloat16))
    w_p = jnp.zeros((K_pad, N_pad), jnp.bfloat16).at[:K, :N].set(
        weight.astype(jnp.bfloat16))
    b_p = jnp.zeros((1, N_pad), jnp.float32).at[0, :N].set(
        bias.astype(jnp.float32))

    out = pl.pallas_call(
        _patch_proj_kernel,
        out_shape=jax.ShapeDtypeStruct((M_pad, N_pad), jnp.float32),
        grid_spec=pltpu.PrefetchScalarGridSpec(
            num_scalar_prefetch=0,
            grid=(M_pad // TM,),
            in_specs=[
                pl.BlockSpec((TM, K_pad), lambda i: (i, 0)),     # streamed rows
                pl.BlockSpec((K_pad, N_pad), lambda i: (0, 0)),  # resident weight
                pl.BlockSpec((1, N_pad), lambda i: (0, 0)),      # resident bias
            ],
            out_specs=pl.BlockSpec((TM, N_pad), lambda i: (i, 0)),
        ),
        compiler_params=pltpu.CompilerParams(
            dimension_semantics=("parallel",)),
    )(x_p, w_p, b_p)
    return out[:M, :N]


def patch_embed_forward(x, conv_weight, conv_bias, patch_size):
    """Mirror of PatchEmbed.forward.

    x:           (B, C, T, H, W)  float32   (NCTHW, PyTorch layout)
    conv_weight: (embed_dim, C, p, p)       (PyTorch Conv2d weight layout)
    conv_bias:   (embed_dim,)
    Returns (tokens, T, W_out):
      tokens: (B*T, num_patches, embed_dim), W_out = W // p
    """
    B, C, T, H, W = x.shape
    p = patch_size
    Hp, Wp = H // p, W // p
    embed_dim = conv_weight.shape[0]

    # b c t h w -> (b t) c h w
    x = jnp.transpose(x, (0, 2, 1, 3, 4)).reshape(B * T, C, H, W)

    # Extract non-overlapping p x p patches:
    # (BT, C, Hp, p, Wp, p) -> (BT, Hp, Wp, C, p, p) -> (BT*Hp*Wp, C*p*p)
    patches = x.reshape(B * T, C, Hp, p, Wp, p)
    patches = jnp.transpose(patches, (0, 2, 4, 1, 3, 5))
    patches = patches.reshape(B * T * Hp * Wp, C * p * p)

    # Conv weight (E, C, p, p) -> (C*p*p, E); matches patch flattening order.
    w = conv_weight.reshape(embed_dim, C * p * p).T

    out = patch_proj(patches, w, conv_bias)          # (BT*num_patches, E)
    tokens = out.reshape(B * T, Hp * Wp, embed_dim)  # == flatten(2).transpose(1,2)
    return tokens, T, Wp


if __name__ == "__main__":
    # Small, deterministic example shapes consistent with the module.
    B, C, T, H, W = 2, 3, 2, 16, 16
    patch = 8
    embed_dim = 32

    key = jax.random.PRNGKey(0)
    kx, kw, kb = jax.random.split(key, 3)
    x = jax.random.normal(kx, (B, C, T, H, W), dtype=jnp.float32)
    conv_weight = jax.random.normal(kw, (embed_dim, C, patch, patch),
                                    dtype=jnp.float32) * 0.02
    conv_bias = jax.random.normal(kb, (embed_dim,), dtype=jnp.float32) * 0.02

    tokens, T_out, W_out = patch_embed_forward(x, conv_weight, conv_bias, patch)
    jax.block_until_ready(tokens)

    # Reference check against plain-JAX strided conv (same math, f32).
    xr = jnp.transpose(x, (0, 2, 1, 3, 4)).reshape(B * T, C, H, W)
    ref = jax.lax.conv_general_dilated(
        xr, conv_weight, window_strides=(patch, patch), padding="VALID",
        dimension_numbers=("NCHW", "OIHW", "NCHW"))
    ref = ref + conv_bias[None, :, None, None]
    ref = ref.reshape(B * T, embed_dim, -1).transpose(0, 2, 1)

    assert tokens.shape == (B * T, (H // patch) * (W // patch), embed_dim)
    assert T_out == T and W_out == W // patch
    # bf16 MXU inputs -> loosened tolerance vs. the pure-f32 reference.
    assert jnp.allclose(tokens, ref, atol=2e-2, rtol=2e-2)

    print("KERNEL_OK")
</pallas_src>

<mosaic_0001>
module attributes {stable_mosaic.version = 11 : i64} {
  func.func @_patch_proj_kernel(%arg0: i32, %arg1: memref<16x256xbf16, #tpu.memory_space<vmem>>, %arg2: memref<256x128xbf16, #tpu.memory_space<vmem>>, %arg3: memref<1x128xf32, #tpu.memory_space<vmem>>, %arg4: memref<16x128xf32, #tpu.memory_space<vmem>>) attributes {dimension_semantics = [#tpu.dimension_semantics<parallel>], iteration_bounds = array<i64: 1>, scalar_prefetch = 0 : i64, scratch_operands = 0 : i64, tpu.core_type = #tpu.core_type<tc>, window_params = [{transform_indices = @transform_0, window_bounds = array<i64: 16, 256>}, {pipeline_mode = #tpu.pipeline_mode<synchronous>, transform_indices = @transform_1, window_bounds = array<i64: 256, 128>}, {pipeline_mode = #tpu.pipeline_mode<synchronous>, transform_indices = @transform_2, window_bounds = array<i64: 1, 128>}, {transform_indices = @transform_3, window_bounds = array<i64: 16, 128>}]} {
    %c0 = arith.constant 0 : index
    %c0_0 = arith.constant 0 : index
    %0 = vector.load %arg1[%c0, %c0_0] : memref<16x256xbf16, #tpu.memory_space<vmem>>, vector<16x256xbf16>
    %c0_1 = arith.constant 0 : index
    %c0_2 = arith.constant 0 : index
    %1 = vector.load %arg2[%c0_1, %c0_2] : memref<256x128xbf16, #tpu.memory_space<vmem>>, vector<256x128xbf16>
    %cst = arith.constant dense<0.000000e+00> : vector<16x128xf32>
    %2 = tpu.matmul %0, %1, %cst {dimension_numbers = #tpu.dot_dimension_numbers<[1], [0], [0], [1], [0, 0, 1, 1], [], []>} : vector<16x256xbf16>, vector<256x128xbf16>, vector<16x128xf32> -> vector<16x128xf32>
    %c0_3 = arith.constant 0 : index
    %c0_4 = arith.constant 0 : index
    %3 = vector.load %arg3[%c0_3, %c0_4] : memref<1x128xf32, #tpu.memory_space<vmem>>, vector<1x128xf32>
    %4 = vector.broadcast %3 : vector<1x128xf32> to vector<16x128xf32>
    %5 = arith.addf %2, %4 : vector<16x128xf32>
    %c0_5 = arith.constant 0 : index
    %c0_6 = arith.constant 0 : index
    %6 = vector.load %arg4[%c0_5, %c0_6] : memref<16x128xf32, #tpu.memory_space<vmem>>, vector<16x128xf32>
    tpu.vector_store %arg4[%c0_5, %c0_6], %5 {strides = array<i32>} : memref<16x128xf32, #tpu.memory_space<vmem>>, vector<16x128xf32>,
    return
  }
  func.func @transform_0(%arg0: i32) -> (i32, i32) {
    %c0_i32 = arith.constant 0 : i32
    %c0_i32_0 = arith.constant 0 : i32
    return %arg0, %c0_i32 : i32, i32
  }
  func.func @transform_1(%arg0: i32) -> (i32, i32) {
    %c0_i32 = arith.constant 0 : i32
    %c0_i32_0 = arith.constant 0 : i32
    %c0_i32_1 = arith.constant 0 : i32
    return %c0_i32, %c0_i32_0 : i32, i32
  }
  func.func @transform_2(%arg0: i32) -> (i32, i32) {
    %c0_i32 = arith.constant 0 : i32
    %c0_i32_0 = arith.constant 0 : i32
    %c0_i32_1 = arith.constant 0 : i32
    return %c0_i32, %c0_i32_0 : i32, i32
  }
  func.func @transform_3(%arg0: i32) -> (i32, i32) {
    %c0_i32 = arith.constant 0 : i32
    %c0_i32_0 = arith.constant 0 : i32
    return %arg0, %c0_i32 : i32, i32
  }
}

</mosaic_0001>

<llo_original>
// kernel: tpu_custom_call.1
$region0: #{tpu_custom_call.1}
  #allocation0 [shape = 'u32[]', space=smem, size = 0x4, offset = 0x4, fixed_abs, tag = 'smem constant byte address 0x4 - core index']
  #allocation1 [shape = 'u32[72,128]{1,0:T(1,128)}', space=vmem, size = 0x9000, scoped, tag = 'internal scratch']
  %s0 = inlined_call_operand.hbm [shape: bf16[16,256], index: 0, kind: input, shape index: {}]
  %s1 = inlined_call_operand.hbm [shape: bf16[256,128], index: 1, kind: input, shape index: {}]
  %s2 = inlined_call_operand.vmem [shape: f32[1,128], index: 2, kind: input, shape index: {}]
  %s3 = inlined_call_operand.hbm [shape: f32[16,128], index: 3, kind: output, shape index: {}]
  %s4 = sld [smem:[#allocation0]]
  $region30: #{tpu_custom_call.1} parent=0
    _
  %s6 = ssub.s32 1, %s4
  %s7 = scalar_select 0, %s6, %s4
  $region1: #{tpu_custom_call.1} parent=0
    #allocation2 [shape = 'u8[8192]{0}', space=vmem, size = 0x2000, scoped, tag = 'input window, operand 0, single buffered']
    #allocation3 [shape = 's32[1]{0}', space=sflag, size = 0x4, scoped, tag = 'scoped memory for tpu_custom_call.1']
    #allocation4 [shape = 's32[1]{0}', space=sflag, size = 0x4, scoped, tag = 'scoped memory for tpu_custom_call.1']
    #allocation5 [shape = 'u8[65536]{0}', space=vmem, size = 0x10000, scoped, tag = 'input window, operand 1, single buffered']
    #allocation6 [shape = 's32[1]{0}', space=sflag, size = 0x4, scoped, tag = 'scoped memory for tpu_custom_call.1']
    #allocation7 [shape = 'u8[8192]{0}', space=vmem, size = 0x2000, scoped, tag = 'output window, operand 0, single buffered']
    %8 = vsyncpa [#allocation3], 0
    %9 = vsyncpa [#allocation6], 0
    %10 = vsyncpa [#allocation4], 0
    // Predicated region
    $region2: #{tpu_custom_call.1} parent=1 // pred_check
      _
    $region3: #{tpu_custom_call.1} parent=1 // pred_check_branch
      %12 = sbr.rel (0) target = $region5
    $region4: #{tpu_custom_call.1} parent=1 // pred_region
      %14 = vsyncadd [#allocation3], 0
      %s15 = sshll.u32 %s0, 4
      %s16 = int_to_ptr.hbm [resolvable:$true] %s15
      %s17 = sshll.u32 [#allocation2], 4
      %s18 = int_to_ptr.vmem [resolvable:$true] %s17
      %23 = dma.hbm_to_vmem [thread:$0]  %s16, 256, %s18, [#allocation3], 128, 128, 8
    $region5: #{tpu_custom_call.1} parent=1 // pred_fallthru
      _
    // Predicated region
    $region6: #{tpu_custom_call.1} parent=1 // pred_check
      _
    $region7: #{tpu_custom_call.1} parent=1 // pred_check_branch
      %25 = sbr.rel (0) target = $region9
    $region8: #{tpu_custom_call.1} parent=1 // pred_region
      %27 = vsyncadd [#allocation6], 0
      %s28 = sshll.u32 %s1, 4
      %s29 = int_to_ptr.hbm [resolvable:$true] %s28
      %s30 = sshll.u32 [#allocation5], 4
      %s31 = int_to_ptr.vmem [resolvable:$true] %s30
      %36 = dma.hbm_to_vmem [thread:$0]  %s29, 2048, %s31, [#allocation6], 64, 64, 4
    $region9: #{tpu_custom_call.1} parent=1 // pred_fallthru
      _
    // Predicated region
    $region10: #{tpu_custom_call.1} parent=1 // pred_check
      _
    $region11: #{tpu_custom_call.1} parent=1 // pred_check_branch
      %38 = sbr.rel (0) target = $region13
    $region12: #{tpu_custom_call.1} parent=1 // pred_region
      _
    $region13: #{tpu_custom_call.1} parent=1 // pred_fallthru
      _
    // Predicated region
    $region14: #{tpu_custom_call.1} parent=1 // pred_check
      _
    $region15: #{tpu_custom_call.1} parent=1 // pred_check_branch
      %40 = sbr.rel (0) target = $region17
    $region16: #{tpu_custom_call.1} parent=1 // pred_region
      %42 = dma.done [#allocation3], 256
    $region17: #{tpu_custom_call.1} parent=1 // pred_fallthru
      _
    // Predicated region
    $region18: #{tpu_custom_call.1} parent=1 // pred_check
      _
    $region19: #{tpu_custom_call.1} parent=1 // pred_check_branch
      %44 = sbr.rel (0) target = $region21
    $region20: #{tpu_custom_call.1} parent=1 // pred_region
      %46 = dma.done [#allocation6], 2048
    $region21: #{tpu_custom_call.1} parent=1 // pred_fallthru
      _
    %v47 = vld [vmem:[#allocation2] sm:$0xff]
    %v48 = vld [vmem:[#allocation2 + $0x8] sm:$0xff]
    %v49 = vld [vmem:[#allocation5] sm:$0xf]
    %v50 = vld [vmem:[#allocation5 + $0x4] sm:$0xf]
    %v51 = vld [vmem:[#allocation5 + $0x8] sm:$0xf]
    %v52 = vld [vmem:[#allocation5 + $0xc] sm:$0xf]
    %v53 = vld [vmem:[#allocation5 + $0x10] sm:$0xf]
    %v54 = vld [vmem:[#allocation5 + $0x14] sm:$0xf]
    %v55 = vld [vmem:[#allocation5 + $0x18] sm:$0xf]
    %v56 = vld [vmem:[#allocation5 + $0x1c] sm:$0xf]
    %v57 = vld [vmem:[#allocation5 + $0x20] sm:$0xf]
    %v58 = vld [vmem:[#allocation5 + $0x24] sm:$0xf]
    %v59 = vld [vmem:[#allocation5 + $0x28] sm:$0xf]
    %v60 = vld [vmem:[#allocation5 + $0x2c] sm:$0xf]
    %v61 = vld [vmem:[#allocation5 + $0x30] sm:$0xf]
    %v62 = vld [vmem:[#allocation5 + $0x34] sm:$0xf]
    %v63 = vld [vmem:[#allocation5 + $0x38] sm:$0xf]
    %v64 = vld [vmem:[#allocation5 + $0x3c] sm:$0xf]
    %v65 = vld [vmem:[#allocation5 + $0x40] sm:$0xf]
    %v66 = vld [vmem:[#allocation5 + $0x44] sm:$0xf]
    %v67 = vld [vmem:[#allocation5 + $0x48] sm:$0xf]
    %v68 = vld [vmem:[#allocation5 + $0x4c] sm:$0xf]
    %v69 = vld [vmem:[#allocation5 + $0x50] sm:$0xf]
    %v70 = vld [vmem:[#allocation5 + $0x54] sm:$0xf]
    %v71 = vld [vmem:[#allocation5 + $0x58] sm:$0xf]
    %v72 = vld [vmem:[#allocation5 + $0x5c] sm:$0xf]
    %v73 = vld [vmem:[#allocation5 + $0x60] sm:$0xf]
    %v74 = vld [vmem:[#allocation5 + $0x64] sm:$0xf]
    %v75 = vld [vmem:[#allocation5 + $0x68] sm:$0xf]
    %v76 = vld [vmem:[#allocation5 + $0x6c] sm:$0xf]
    %v77 = vld [vmem:[#allocation5 + $0x70] sm:$0xf]
    %v78 = vld [vmem:[#allocation5 + $0x74] sm:$0xf]
    %v79 = vld [vmem:[#allocation5 + $0x78] sm:$0xf]
    %v80 = vld [vmem:[#allocation5 + $0x7c] sm:$0xf]
    %v81 = vld [vmem:[%s2] sm:$0x1]
    %v83 = vperm.slane %v81, 0
    %v87 = vunpack.c.l.b16 %v47
    %v88 = vunpack.c.h.b16 %v47
    %v89 = vunpack.c.l.b16 %v48
    %v90 = vunpack.c.h.b16 %v48
    %v91 = vpack.c.b16 %v89, %v87
    %v92 = vpack.c.b16 %v90, %v88
    %v127 = vunpack.c.l.b16 %v49
    %v128 = vunpack.c.l.b16 %v50
    %v129 = vunpack.c.l.b16 %v51
    %v130 = vunpack.c.l.b16 %v52
    %v131 = vunpack.c.l.b16 %v53
    %v132 = vunpack.c.l.b16 %v54
    %v133 = vunpack.c.l.b16 %v55
    %v134 = vunpack.c.l.b16 %v56
    %v135 = vunpack.c.l.b16 %v57
    %v136 = vunpack.c.l.b16 %v58
    %v137 = vunpack.c.l.b16 %v59
    %v138 = vunpack.c.l.b16 %v60
    %v139 = vunpack.c.l.b16 %v61
    %v140 = vunpack.c.l.b16 %v62
    %v141 = vunpack.c.l.b16 %v63
    %v142 = vunpack.c.l.b16 %v64
    %v143 = vunpack.c.l.b16 %v65
    %v144 = vunpack.c.l.b16 %v66
    %v145 = vunpack.c.l.b16 %v67
    %v146 = vunpack.c.l.b16 %v68
    %v147 = vunpack.c.l.b16 %v69
    %v148 = vunpack.c.l.b16 %v70
    %v149 = vunpack.c.l.b16 %v71
    %v150 = vunpack.c.l.b16 %v72
    %v151 = vunpack.c.l.b16 %v73
    %v152 = vunpack.c.l.b16 %v74
    %v153 = vunpack.c.l.b16 %v75
    %v154 = vunpack.c.l.b16 %v76
    %v155 = vunpack.c.l.b16 %v77
    %v156 = vunpack.c.l.b16 %v78
    %v157 = vunpack.c.l.b16 %v79
    %v158 = vunpack.c.l.b16 %v80
    %v159 = vpack.c.b16 %v128, %v127
    %v160 = vpack.c.b16 %v130, %v129
    %v161 = vpack.c.b16 %v132, %v131
    %v162 = vpack.c.b16 %v134, %v133
    %v163 = vpack.c.b16 %v136, %v135
    %v164 = vpack.c.b16 %v138, %v137
    %v165 = vpack.c.b16 %v140, %v139
    %v166 = vpack.c.b16 %v142, %v141
    %v167 = vpack.c.b16 %v144, %v143
    %v168 = vpack.c.b16 %v146, %v145
    %v169 = vpack.c.b16 %v148, %v147
    %v170 = vpack.c.b16 %v150, %v149
    %v171 = vpack.c.b16 %v152, %v151
    %v172 = vpack.c.b16 %v154, %v153
    %v173 = vpack.c.b16 %v156, %v155
    %v174 = vpack.c.b16 %v158, %v157
    %191 = vmatpush.bf16.msra.mxu0 %v166
    %192 = vmatpush.bf16.msra.mxu0 %v165
    %193 = vmatpush.bf16.msra.mxu0 %v164
    %194 = vmatpush.bf16.msra.mxu0 %v163
    %195 = vmatpush.bf16.msra.mxu0 %v162
    %196 = vmatpush.bf16.msra.mxu0 %v161
    %197 = vmatpush.bf16.msra.mxu0 %v160
    %198 = vmatpush.bf16.msra.mxu0 %v159
    %199 = vmatmul.bf16.gmra.mxu0 %v91
    %v200 = vpop.f32.mrf.mxu0
    %v201 = vadd.f32 %v83, %v200
    %v202 = vpop.f32.mrf.mxu0
    %v203 = vadd.f32 %v83, %v202
    %204 = vdwg.mxu0
    %205 = vmatpush.bf16.msra.mxu0 %v174
    %206 = vmatpush.bf16.msra.mxu0 %v173
    %207 = vmatpush.bf16.msra.mxu0 %v172
    %208 = vmatpush.bf16.msra.mxu0 %v171
    %209 = vmatpush.bf16.msra.mxu0 %v170
    %210 = vmatpush.bf16.msra.mxu0 %v169
    %211 = vmatpush.bf16.msra.mxu0 %v168
    %212 = vmatpush.bf16.msra.mxu0 %v167
    %213 = vmatmul.bf16.gmra.mxu0 %v92
    %v214 = vpop.f32.mrf.mxu0
    %v215 = vadd.f32 %v201, %v214
    %v216 = vpop.f32.mrf.mxu0
    %v217 = vadd.f32 %v203, %v216
    %218 = vdwg.mxu0
    %219 = vst [vmem:[#allocation7] sm:$0xff] %v215
    %220 = vst [vmem:[#allocation7 + $0x8] sm:$0xff] %v217
    // Predicated region
    $region22: #{tpu_custom_call.1} parent=1 // pred_check
      _
    $region23: #{tpu_custom_call.1} parent=1 // pred_check_branch
      %222 = sbr.rel (0) target = $region25
    $region24: #{tpu_custom_call.1} parent=1 // pred_region
      %224 = vsyncadd [#allocation4], 0
      %s225 = sshll.u32 [#allocation7], 4
      %s226 = int_to_ptr.vmem [resolvable:$true] %s225
      %s227 = sshll.u32 %s3, 4
      %s228 = int_to_ptr.hbm [resolvable:$true] %s227
      %233 = dma.vmem_to_hbm [thread:$0]  %s226, 256, %s228, [#allocation4], 128, 128, 8
    $region25: #{tpu_custom_call.1} parent=1 // pred_fallthru
      _
    // Predicated region
    $region26: #{tpu_custom_call.1} parent=1 // pred_check
      _
    $region27: #{tpu_custom_call.1} parent=1 // pred_check_branch
      %235 = sbr.rel (0) target = $region29
    $region28: #{tpu_custom_call.1} parent=1 // pred_region
      %237 = dma.done [#allocation4], 256
    $region29: #{tpu_custom_call.1} parent=1 // pred_fallthru
      _
    %238 = vsyncpa [#allocation3], 1
    %239 = vsyncpa [#allocation6], 1
    %240 = vsyncpa [#allocation4], 1

</llo_original>
